<compile_context>
chip_gen: v7x
topology: tpu7x:2x2x1
jax: 0.10.0
libtpu: 0.0.40
codegen_flags: <defaults>
</compile_context>

<pallas_src>
import functools
import math

import jax
import jax.numpy as jnp
from jax import lax
from jax.experimental import pallas as pl
from jax.experimental.pallas import tpu as pltpu


def _pair(v):
    if isinstance(v, (tuple, list)):
        a, b = v
        return int(a), int(b)
    return int(v), int(v)


def _round_up(a, m):
    return ((a + m - 1) // m) * m


def _maxpool2d_kernel(x_ref, o_ref, *, kH, kW, sH, sW, dH, dW, H_out, W_out):
    """x_ref: (bb, sH, sW, H1, W1) space-to-batch tile; o_ref: (bb, H_out, W_out)."""
    acc = None
    for kh in range(kH):
        oh, rh = divmod(kh * dH, sH)        # which plane / unit-stride row shift
        for kw in range(kW):
            ow, rw = divmod(kw * dW, sW)
            # Static leading indices + unit-stride trailing slices only.
            win = x_ref[:, rh, rw, oh:oh + H_out, ow:ow + W_out]
            acc = win if acc is None else jnp.maximum(acc, win)
    o_ref[...] = acc


def maxpool2d_forward(x, kernel_size, stride=None, padding=0, dilation=1):
    """F.max_pool2d(x, k, s, p, d) for NCHW (or CHW) float inputs, floor mode."""
    kH, kW = _pair(kernel_size)
    sH, sW = _pair(kernel_size if stride is None else stride)
    pH, pW = _pair(padding)
    dH, dW = _pair(dilation)

    *lead, H, W = x.shape
    lead = tuple(lead)
    B = int(math.prod(lead)) if lead else 1

    H_out = (H + 2 * pH - dH * (kH - 1) - 1) // sH + 1
    W_out = (W + 2 * pW - dW * (kW - 1) - 1) // sW + 1
    assert H_out > 0 and W_out > 0, "pooling window larger than (padded) input"

    if jnp.issubdtype(x.dtype, jnp.floating):
        neg = float("-inf")
    else:
        neg = int(jnp.iinfo(x.dtype).min)

    xb = x.reshape(B, H, W)
    if pH or pW:                        # max-pool padding must not win the max
        xb = jnp.pad(xb, ((0, 0), (pH, pH), (pW, pW)), constant_values=neg)
    Hp, Wp = H + 2 * pH, W + 2 * pW

    # Space-to-batch geometry: source row q*sH + r lands at [r, q] of (sH, H1).
    H1 = H_out + ((kH - 1) * dH) // sH
    W1 = W_out + ((kW - 1) * dW) // sW
    H2, W2 = H1 * sH, W1 * sW
    if Hp < H2 or Wp < W2:              # tail rows/cols are never read by the kernel
        xb = jnp.pad(xb, ((0, 0), (0, max(0, H2 - Hp)), (0, max(0, W2 - Wp))),
                     constant_values=neg)
    xb = xb[:, :H2, :W2]
    # (B,H2,W2) -> (B,H1,sH,W1,sW) is a free row-major split; the transpose to
    # (B,sH,sW,H1,W1) is the single layout pass that makes all kernel accesses
    # unit-stride (no lane-strided slices / gathers needed inside the kernel).
    xs = xb.reshape(B, H1, sH, W1, sW).transpose(0, 2, 4, 1, 3)

    # Block over B: multi-MiB working set per step, >=2 steps when possible
    # (megacore), comfortably inside scoped VMEM with double buffering on
    # v5e (16 MiB default) / v6e / v7x.
    itemsize = jnp.dtype(x.dtype).itemsize
    in_bytes_per_b = sH * sW * _round_up(H1, 8) * _round_up(W1, 128) * itemsize
    out_bytes_per_b = _round_up(H_out, 8) * _round_up(W_out, 128) * itemsize
    target = 4 * 1024 * 1024
    block_b = max(1, min(B, target // max(1, in_bytes_per_b + out_bytes_per_b)))
    if B > 1:
        block_b = max(1, min(block_b, pl.cdiv(B, 2)))
    grid = (pl.cdiv(B, block_b),)

    kernel = functools.partial(
        _maxpool2d_kernel, kH=kH, kW=kW, sH=sH, sW=sW, dH=dH, dW=dW,
        H_out=H_out, W_out=W_out)

    out = pl.pallas_call(
        kernel,
        out_shape=jax.ShapeDtypeStruct((B, H_out, W_out), x.dtype),
        grid_spec=pltpu.PrefetchScalarGridSpec(
            num_scalar_prefetch=0,
            grid=grid,
            in_specs=[pl.BlockSpec((block_b, sH, sW, H1, W1),
                                   lambda i: (i, 0, 0, 0, 0))],
            out_specs=pl.BlockSpec((block_b, H_out, W_out),
                                   lambda i: (i, 0, 0)),
        ),
        compiler_params=pltpu.CompilerParams(
            dimension_semantics=("parallel",),
            vmem_limit_bytes=32 * 1024 * 1024,
        ),
    )(xs)

    return out.reshape(*lead, H_out, W_out)


if __name__ == "__main__":
    key = jax.random.PRNGKey(0)
    # Matches the module's typical use: input_dim = (4, 16, 16), batch = 2 (NCHW).
    x = jax.random.normal(key, (2, 4, 16, 16), dtype=jnp.float32)

    # MaxPool2d(k=2): stride defaults to kernel_size, padding=0, dilation=1.
    y = jax.block_until_ready(maxpool2d_forward(x, kernel_size=2))
    ref = x.reshape(2, 4, 8, 2, 8, 2).max(axis=(3, 5))
    assert y.shape == (2, 4, 8, 8) and y.dtype == x.dtype
    assert bool(jnp.all(y == ref))

    # Overlapping-window config: MaxPool2d(k=3, s=2).
    y2 = jax.block_until_ready(maxpool2d_forward(x, kernel_size=3, stride=2))
    ref2 = lax.reduce_window(x, -jnp.inf, lax.max,
                             window_dimensions=(1, 1, 3, 3),
                             window_strides=(1, 1, 2, 2),
                             padding="VALID")
    assert y2.shape == (2, 4, 7, 7)
    assert bool(jnp.all(y2 == ref2))

    print("KERNEL_OK")
</pallas_src>

<mosaic_0001>
module attributes {stable_mosaic.version = 11 : i64} {
  func.func @_maxpool2d_kernel(%arg0: i32, %arg1: memref<4x2x2x8x8xf32, #tpu.memory_space<vmem>>, %arg2: memref<4x8x8xf32, #tpu.memory_space<vmem>>) attributes {dimension_semantics = [#tpu.dimension_semantics<parallel>], iteration_bounds = array<i64: 2>, scalar_prefetch = 0 : i64, scratch_operands = 0 : i64, tpu.core_type = #tpu.core_type<tc>, window_params = [{transform_indices = @transform_0, window_bounds = array<i64: 4, 2, 2, 8, 8>}, {transform_indices = @transform_1, window_bounds = array<i64: 4, 8, 8>}]} {
    %c0 = arith.constant 0 : index
    %c0_0 = arith.constant 0 : index
    %c0_1 = arith.constant 0 : index
    %c0_2 = arith.constant 0 : index
    %c0_3 = arith.constant 0 : index
    %0 = vector.load %arg1[%c0, %c0_0, %c0_1, %c0_2, %c0_3] : memref<4x2x2x8x8xf32, #tpu.memory_space<vmem>>, vector<4x1x1x8x8xf32>
    %1 = vector.shape_cast %0 : vector<4x1x1x8x8xf32> to vector<4x8x8xf32>
    %c0_4 = arith.constant 0 : index
    %c0_5 = arith.constant 0 : index
    %c1 = arith.constant 1 : index
    %c0_6 = arith.constant 0 : index
    %c0_7 = arith.constant 0 : index
    %2 = vector.load %arg1[%c0_4, %c0_5, %c1, %c0_6, %c0_7] : memref<4x2x2x8x8xf32, #tpu.memory_space<vmem>>, vector<4x1x1x8x8xf32>
    %3 = vector.shape_cast %2 : vector<4x1x1x8x8xf32> to vector<4x8x8xf32>
    %4 = arith.maximumf %1, %3 : vector<4x8x8xf32>
    %c0_8 = arith.constant 0 : index
    %c1_9 = arith.constant 1 : index
    %c0_10 = arith.constant 0 : index
    %c0_11 = arith.constant 0 : index
    %c0_12 = arith.constant 0 : index
    %5 = vector.load %arg1[%c0_8, %c1_9, %c0_10, %c0_11, %c0_12] : memref<4x2x2x8x8xf32, #tpu.memory_space<vmem>>, vector<4x1x1x8x8xf32>
    %6 = vector.shape_cast %5 : vector<4x1x1x8x8xf32> to vector<4x8x8xf32>
    %7 = arith.maximumf %4, %6 : vector<4x8x8xf32>
    %c0_13 = arith.constant 0 : index
    %c1_14 = arith.constant 1 : index
    %c1_15 = arith.constant 1 : index
    %c0_16 = arith.constant 0 : index
    %c0_17 = arith.constant 0 : index
    %8 = vector.load %arg1[%c0_13, %c1_14, %c1_15, %c0_16, %c0_17] : memref<4x2x2x8x8xf32, #tpu.memory_space<vmem>>, vector<4x1x1x8x8xf32>
    %9 = vector.shape_cast %8 : vector<4x1x1x8x8xf32> to vector<4x8x8xf32>
    %10 = arith.maximumf %7, %9 : vector<4x8x8xf32>
    %c0_18 = arith.constant 0 : index
    %c0_19 = arith.constant 0 : index
    %c0_20 = arith.constant 0 : index
    %11 = vector.load %arg2[%c0_18, %c0_19, %c0_20] : memref<4x8x8xf32, #tpu.memory_space<vmem>>, vector<4x8x8xf32>
    tpu.vector_store %arg2[%c0_18, %c0_19, %c0_20], %10 {strides = array<i32>} : memref<4x8x8xf32, #tpu.memory_space<vmem>>, vector<4x8x8xf32>,
    return
  }
  func.func @transform_0(%arg0: i32) -> (i32, i32, i32, i32, i32) {
    %c0_i32 = arith.constant 0 : i32
    %c0_i32_0 = arith.constant 0 : i32
    %c0_i32_1 = arith.constant 0 : i32
    %c0_i32_2 = arith.constant 0 : i32
    %c0_i32_3 = arith.constant 0 : i32
    return %arg0, %c0_i32, %c0_i32_0, %c0_i32_1, %c0_i32_2 : i32, i32, i32, i32, i32
  }
  func.func @transform_1(%arg0: i32) -> (i32, i32, i32) {
    %c0_i32 = arith.constant 0 : i32
    %c0_i32_0 = arith.constant 0 : i32
    %c0_i32_1 = arith.constant 0 : i32
    return %arg0, %c0_i32, %c0_i32_0 : i32, i32, i32
  }
}

</mosaic_0001>

<llo_original>
// kernel: tpu_custom_call.1
$region0: #{tpu_custom_call.1}
  #allocation0 [shape = 'u32[]', space=smem, size = 0x4, offset = 0x4, fixed_abs, tag = 'smem constant byte address 0x4 - core index']
  #allocation1 [shape = 'u32[144,128]{1,0:T(1,128)}', space=vmem, size = 0x12000, scoped, tag = 'internal scratch']
  %s0 = inlined_call_operand.hbm [shape: f32[8,2,2,8,8], index: 0, kind: input, shape index: {}]
  %s1 = inlined_call_operand.hbm [shape: f32[8,8,8], index: 1, kind: output, shape index: {}]
  %s2 = sld [smem:[#allocation0]]
  $region41: #{tpu_custom_call.1} parent=0
    _
  %s4 = ssub.s32 1, %s2
  %s5 = scalar_select 0, %s4, %s2
  $region1: #{tpu_custom_call.1} parent=0
    #allocation2 [shape = 'u8[131072]{0}', space=vmem, size = 0x20000, scoped, tag = 'input window, operand 0']
    #allocation3 [shape = 's32[2]{0}', space=sflag, size = 0x8, scoped, tag = 'scoped memory for tpu_custom_call.1']
    #allocation4 [shape = 's32[2]{0}', space=sflag, size = 0x8, scoped, tag = 'scoped memory for tpu_custom_call.1']
    #allocation5 [shape = 'u8[32768]{0}', space=vmem, size = 0x8000, scoped, tag = 'output window, operand 0']
    %6 = vsyncpa [#allocation3], 0
    %s7 = scalar_lea.sflag [#allocation3], 1
    %8 = vsyncpa %s7, 0
    %9 = vsyncpa [#allocation4], 0
    %s10 = scalar_lea.sflag [#allocation4], 1
    %11 = vsyncpa %s10, 0
    loop: start=0, step=1, limit=4
    $region2: #{tpu_custom_call.1} parent=1 // loop_pre_header
      _
    $region3: #{tpu_custom_call.1} parent=1 // loop_header
      %s13 = sphi 0, %s17
      %p14 = scmp.ge.s32.totalorder %s13, 4
      %s23 = sphi 0, %s25
      %s26 = sphi 0, %s23
      %s27 = sphi 0, %s26
      %s43 = sphi 0, %s27
      %s49 = sphi 0, %s51
      %s52 = sphi 0, %s49
      %s53 = sphi 0, %s52
      %s69 = sphi 0, %s53
    $region4: #{tpu_custom_call.1} parent=1 // loop_header_branch
      %16 = sbr.rel (%p14) target = $region8
    $region5: #{tpu_custom_call.1} parent=1 // loop_body
      %s18 = ssub.s32 %s13, 1
      %s19 = ssub.s32 %s13, 2
      %s20 = sadd.s32 %s13, 1
      %s21 = ssub.s32 %s13, %s20
      %p22 = scmp.eq.s32.totalorder %s21, 0
      %s24 = sadd.s32 %s23, 1
      %s25 = scalar_select %p22, %s23, %s24
      %p28 = pneg %p22
      %p29 = scmp.eq.s32.totalorder %s13, 1
      %p30 = por %p28, %p29
      %p31 = scmp.ne.s32.totalorder %s23, %s26
      %p32 = scmp.eq.s32.totalorder %s13, 0
      %p33 = por %p31, %p32
      %p34 = scmp.ne.s32.totalorder %s23, %s26
      %p35 = scmp.eq.s32.totalorder %s18, 1
      %p36 = por %p34, %p35
      %p37 = scmp.ne.s32.totalorder %s26, %s27
      %p38 = scmp.eq.s32.totalorder %s18, 0
      %p39 = por %p37, %p38
      %p40 = scmp.ne.s32.totalorder %s26, %s27
      %p41 = scmp.eq.s32.totalorder %s19, 1
      %p42 = por %p40, %p41
      %p44 = scmp.ne.s32.totalorder %s27, %s43
      %p45 = scmp.eq.s32.totalorder %s19, 0
      %p46 = por %p44, %p45
      %s47 = ssub.s32 %s13, %s20
      %p48 = scmp.eq.s32.totalorder %s47, 0
      %s50 = sadd.s32 %s49, 1
      %s51 = scalar_select %p48, %s49, %s50
      %p54 = pneg %p48
      %p55 = scmp.eq.s32.totalorder %s13, 1
      %p56 = por %p54, %p55
      %p57 = scmp.ne.s32.totalorder %s49, %s52
      %p58 = scmp.eq.s32.totalorder %s13, 0
      %p59 = por %p57, %p58
      %p60 = scmp.ne.s32.totalorder %s49, %s52
      %p61 = scmp.eq.s32.totalorder %s18, 1
      %p62 = por %p60, %p61
      %p63 = scmp.ne.s32.totalorder %s52, %s53
      %p64 = scmp.eq.s32.totalorder %s18, 0
      %p65 = por %p63, %p64
      %p66 = scmp.ne.s32.totalorder %s52, %s53
      %p67 = scmp.eq.s32.totalorder %s19, 1
      %p68 = por %p66, %p67
      %p70 = scmp.ne.s32.totalorder %s53, %s69
      %p71 = scmp.eq.s32.totalorder %s19, 0
      %p72 = por %p70, %p71
      %p73 = scmp.le.s32.totalorder 1, %s13
      %p74 = scmp.lt.s32.totalorder %s13, 3
      %p75 = pnand %p73, %p74
      %p76 = pneg %p75
      // Predicated region
      $region9: #{tpu_custom_call.1} parent=5 // pred_check
        _
      $region10: #{tpu_custom_call.1} parent=5 // pred_check_branch
        %78 = sbr.rel (%p75) target = $region12
      $region11: #{tpu_custom_call.1} parent=5 // pred_region
        %s79 = ssub.s32 %s13, 1
      $region12: #{tpu_custom_call.1} parent=5 // pred_fallthru
        _
      %p80 = scmp.lt.s32.totalorder %s13, 2
      // Predicated region
      $region13: #{tpu_custom_call.1} parent=5 // pred_check
        %p81 = pneg %p80
      $region14: #{tpu_custom_call.1} parent=5 // pred_check_branch
        %83 = sbr.rel (%p81) target = $region16
      $region15: #{tpu_custom_call.1} parent=5 // pred_region
        // Predicated region
        $region17: #{tpu_custom_call.1} parent=15 // pred_check
          %p84 = pneg %p33
        $region18: #{tpu_custom_call.1} parent=15 // pred_check_branch
          %86 = sbr.rel (%p84) target = $region20
        $region19: #{tpu_custom_call.1} parent=15 // pred_region
          %s87 = sand.u32 %s23, 1
          %s88 = scalar_lea.sflag [#allocation3], %s87
          %s89 = sand.u32 %s23, 1
          %s90 = smul.addr %s89, 128
          %s91 = scalar_lea.vmem [#allocation2], %s90
          %s92 = smul.u32 4, %s13
          %s94 = ssub.s32 2048, 2048
          %95 = vsyncadd %s88, %s94
          %s96 = smul.addr %s92, 4
          %s97 = smul.addr %s96, 128
          %s98 = scalar_lea.hbm %s0, %s97
          %s99 = sshll.u32 %s91, 4
          %s100 = int_to_ptr.vmem [resolvable:$true] %s99
          %105 = dma.hbm_to_vmem [thread:$0]  %s98, 2048, %s100, %s88, 128, 128, 8
        $region20: #{tpu_custom_call.1} parent=15 // pred_fallthru
          _
      $region16: #{tpu_custom_call.1} parent=5 // pred_fallthru
        _
      %p106 = scmp.le.s32.totalorder 1, %s13
      %p107 = scmp.lt.s32.totalorder %s13, 3
      %p108 = pnand %p106, %p107
      %p109 = pneg %p108
      // Predicated region
      $region21: #{tpu_custom_call.1} parent=5 // pred_check
        _
      $region22: #{tpu_custom_call.1} parent=5 // pred_check_branch
        %111 = sbr.rel (%p108) target = $region24
      $region23: #{tpu_custom_call.1} parent=5 // pred_region
        %s112 = ssub.s32 %s13, 1
        %s113 = sand.u32 %s26, 1
        %s114 = scalar_lea.sflag [#allocation3], %s113
        %s115 = sand.u32 %s26, 1
        %s116 = smul.addr %s115, 128
        %s117 = scalar_lea.vmem [#allocation2], %s116
        // Predicated region
        $region25: #{tpu_custom_call.1} parent=23 // pred_check
          %p118 = pneg %p39
        $region26: #{tpu_custom_call.1} parent=23 // pred_check_branch
          %120 = sbr.rel (%p118) target = $region28
        $region27: #{tpu_custom_call.1} parent=23 // pred_region
          %121 = dma.done %s114, 2048
        $region28: #{tpu_custom_call.1} parent=23 // pred_fallthru
          _
        %s122 = sand.u32 %s26, 1
        %s123 = scalar_lea.sflag [#allocation3], %s122
        %s124 = sand.u32 %s26, 1
        %s125 = smul.addr %s124, 128
        %s126 = scalar_lea.vmem [#allocation2], %s125
        %p127 = pneg %p39
        %p128 = pneg %p36
        %p129 = pneg %p65
        %p130 = pneg %p62
        %s131 = sand.u32 %s52, 1
        %s132 = scalar_lea.sflag [#allocation4], %s131
        %s133 = sand.u32 %s52, 1
        %s134 = smul.addr %s133, 32
        %s135 = scalar_lea.vmem [#allocation5], %s134
        %s136 = smul.u32 4, %s18
        %s137 = smul.u32 4, %s18
        %v138 = vld [vmem:[%s117] sm:$0xff]
        %v139 = vld [vmem:[%s117 + $0x20] sm:$0xff]
        %v140 = vld [vmem:[%s117 + $0x40] sm:$0xff]
        %v141 = vld [vmem:[%s117 + $0x60] sm:$0xff]
        %s142 = scalar_lea.vmem %s117, 8 [#allocation2]
        %v143 = vld [vmem:[%s142] sm:$0xff]
        %v144 = vld [vmem:[%s142 + $0x20] sm:$0xff]
        %v145 = vld [vmem:[%s142 + $0x40] sm:$0xff]
        %v146 = vld [vmem:[%s142 + $0x60] sm:$0xff]
        %v147 = vmax.f32 %v138, %v143
        %v148 = vmax.f32 %v139, %v144
        %v149 = vmax.f32 %v140, %v145
        %v150 = vmax.f32 %v141, %v146
        %s151 = scalar_lea.vmem %s117, 16 [#allocation2]
        %v152 = vld [vmem:[%s151] sm:$0xff]
        %v153 = vld [vmem:[%s151 + $0x20] sm:$0xff]
        %v154 = vld [vmem:[%s151 + $0x40] sm:$0xff]
        %v155 = vld [vmem:[%s151 + $0x60] sm:$0xff]
        %v156 = vmax.f32 %v147, %v152
        %v157 = vmax.f32 %v148, %v153
        %v158 = vmax.f32 %v149, %v154
        %v159 = vmax.f32 %v150, %v155
        %s160 = scalar_lea.vmem %s117, 24 [#allocation2]
        %v161 = vld [vmem:[%s160] sm:$0xff]
        %v162 = vld [vmem:[%s160 + $0x20] sm:$0xff]
        %v163 = vld [vmem:[%s160 + $0x40] sm:$0xff]
        %v164 = vld [vmem:[%s160 + $0x60] sm:$0xff]
        %v165 = vmax.f32 %v156, %v161
        %v166 = vmax.f32 %v157, %v162
        %v167 = vmax.f32 %v158, %v163
        %v168 = vmax.f32 %v159, %v164
        %vm169 = vcmask 64512
        %170 = vst.msk [vmem:[%s135] sm:$0xff] %vm169, %v165
        %171 = vst.msk [vmem:[%s135 + $0x8] sm:$0xff] %vm169, %v166
        %172 = vst.msk [vmem:[%s135 + $0x10] sm:$0xff] %vm169, %v167
        %173 = vst.msk [vmem:[%s135 + $0x18] sm:$0xff] %vm169, %v168
        %s174 = sand.u32 %s52, 1
        %s175 = scalar_lea.sflag [#allocation4], %s174
        %s176 = sand.u32 %s52, 1
        %s177 = smul.addr %s176, 32
        %s178 = scalar_lea.vmem [#allocation5], %s177
        // Predicated region
        $region29: #{tpu_custom_call.1} parent=23 // pred_check
          %p179 = pneg %p62
        $region30: #{tpu_custom_call.1} parent=23 // pred_check_branch
          %181 = sbr.rel (%p179) target = $region32
        $region31: #{tpu_custom_call.1} parent=23 // pred_region
          %s182 = smul.u32 4, %s18
          %s184 = ssub.s32 512, 512
          %185 = vsyncadd %s175, %s184
          %s186 = smul.addr %s182, 128
          %s187 = scalar_lea.hbm %s1, %s186
          %s188 = sshll.u32 %s178, 4
          %s189 = int_to_ptr.vmem [resolvable:$true] %s188
          %194 = dma.vmem_to_hbm [thread:$0]  %s189, 512, %s187, %s175, 128, 128, 8
        $region32: #{tpu_custom_call.1} parent=23 // pred_fallthru
          _
      $region24: #{tpu_custom_call.1} parent=5 // pred_fallthru
        _
      %p195 = scmp.le.s32.totalorder 2, %s13
      // Predicated region
      $region33: #{tpu_custom_call.1} parent=5 // pred_check
        %p196 = pneg %p195
      $region34: #{tpu_custom_call.1} parent=5 // pred_check_branch
        %198 = sbr.rel (%p196) target = $region36
      $region35: #{tpu_custom_call.1} parent=5 // pred_region
        %s199 = ssub.s32 %s13, 2
        // Predicated region
        $region37: #{tpu_custom_call.1} parent=35 // pred_check
          %p200 = pneg %p68
        $region38: #{tpu_custom_call.1} parent=35 // pred_check_branch
          %202 = sbr.rel (%p200) target = $region40
        $region39: #{tpu_custom_call.1} parent=35 // pred_region
          %s203 = sand.u32 %s53, 1
          %s204 = scalar_lea.sflag [#allocation4], %s203
          %s205 = sand.u32 %s53, 1
          %s206 = smul.addr %s205, 32
          %s207 = scalar_lea.vmem [#allocation5], %s206
          %208 = dma.done %s204, 512
        $region40: #{tpu_custom_call.1} parent=35 // pred_fallthru
          _
      $region36: #{tpu_custom_call.1} parent=5 // pred_fallthru
        _
    $region6: #{tpu_custom_call.1} parent=1 // loop_footer
      %s17 = sadd.s32 1, %s13
    $region7: #{tpu_custom_call.1} parent=1 // loop_footer_branch
      %12 = sbr.rel target = $region3
    $region8: #{tpu_custom_call.1} parent=1 // loop_exit
      _
    %209 = vsyncpa [#allocation3], 1
    %s210 = scalar_lea.sflag [#allocation3], 1
    %211 = vsyncpa %s210, 1
    %212 = vsyncpa [#allocation4], 1
    %s213 = scalar_lea.sflag [#allocation4], 1
    %214 = vsyncpa %s213, 1

</llo_original>
